<compile_context>
chip_gen: v7x
topology: tpu7x:2x2x1
jax: 0.10.0
libtpu: 0.0.40
codegen_flags: <defaults>
</compile_context>

<pallas_src>
import jax
import jax.numpy as jnp
from jax.experimental import pallas as pl
from jax.experimental.pallas import tpu as pltpu

# ----------------------------------------------------------------------------
# Synthetic deterministic skeleton (stands in for common.skeleton.Skeleton)
# ----------------------------------------------------------------------------
PARENTS = (-1, 0, 1, 2, 1)          # parents[0] == -1 (root)
T_POSE_OPERATORS = (                 # unit bone directions, index 0 unused
    (0.0, 0.0, 0.0),
    (0.0, 1.0, 0.0),
    (1.0, 0.0, 0.0),
    (0.0, 0.0, 1.0),
    (-1.0, 0.0, 0.0),
)
NUM_JOINTS = len(PARENTS)
NUM_BONES = NUM_JOINTS - 1
ROT_REP_DIM = 6
EPS = 1e-8

CHILDREN = tuple(tuple(c for c in range(NUM_JOINTS) if PARENTS[c] == j)
                 for j in range(NUM_JOINTS))
HAS_CHILD = tuple(len(CHILDREN[j]) > 0 for j in range(NUM_JOINTS))
CHILD_JOINTS = tuple(j for j in range(NUM_JOINTS) if HAS_CHILD[j])
NUM_ROT_CH = len(CHILD_JOINTS) * ROT_REP_DIM            # rot channels kept
ROT_BASE = {j: i * ROT_REP_DIM for i, j in enumerate(CHILD_JOINTS)}


def _needed_cols(j):
    """Columns of joint j's world rotation that are actually consumed."""
    if not HAS_CHILD[j]:
        return ()
    if any(HAS_CHILD[c] for c in CHILDREN[j]):
        return (0, 1, 2)     # full matrix needed to compose a child's world R
    cols = set()
    for c in CHILDREN[j]:
        for k in range(3):
            if T_POSE_OPERATORS[c][k] != 0.0:
                cols.add(k)
    return tuple(sorted(cols))


NEEDED_COLS = tuple(_needed_cols(j) for j in range(NUM_JOINTS))

# Static invariants the pruned kernel relies on.
for _j in range(NUM_JOINTS):
    _p = PARENTS[_j]
    if _p >= 0:
        for _k in range(3):
            if T_POSE_OPERATORS[_j][_k] != 0.0:
                assert _k in NEEDED_COLS[_p]
        if HAS_CHILD[_j]:
            assert NEEDED_COLS[_p] == (0, 1, 2)

LANE = 128      # vreg lane width
STRIP = 8       # sublane strip processed at a time (1 vreg per f32 value)


def _cdiv(a, b):
    return -(-a // b)


def _round_up(x, m):
    return ((x + m - 1) // m) * m


# ----------------------------------------------------------------------------
# Kernel
# ----------------------------------------------------------------------------
def pose_decoder_kernel(rot_ref, bones_ref, root_ref, out_ref):
    """Full PoseDecoder forward hot path on one batch super-tile.

    rot_ref   : (NUM_ROT_CH, SUB, 128) f32  6D rot repr, child-bearing joints only
    bones_ref : (NUM_BONES,  SUB, 128) f32  bone lengths (per flattened sample)
    root_ref  : (3,          SUB, 128) f32  root joint world positions
    out_ref   : (J*3,        SUB, 128) f32  world keypoint positions, row=j*3+c
    """
    sub = rot_ref.shape[1]
    n_strips = sub // STRIP

    # TODO(synk): if the kernel turns VALU-bound after the HBM fixes (most
    # likely on v7x), unroll this strip loop so the LLO scheduler can overlap
    # strip i+1 loads with strip i compute.
    @pl.loop(0, n_strips)
    def _strip(si):
        row0 = pl.multiple_of(si * STRIP, STRIP)
        sl = pl.ds(row0, STRIP)

        def ld(ref, r):
            return ref[r, sl, :]                       # dense (8, 128) tile

        def normalize(v):
            # 1 / max(|v|, EPS) == rsqrt(max(|v|^2, EPS^2))  (EUP, no divides)
            mag2 = v[0] * v[0] + v[1] * v[1] + v[2] * v[2]
            inv = jax.lax.rsqrt(jnp.maximum(mag2, EPS * EPS))
            return [v[0] * inv, v[1] * inv, v[2] * inv]

        def cross(a, b):
            return [a[1] * b[2] - a[2] * b[1],
                    a[2] * b[0] - a[0] * b[2],
                    a[0] * b[1] - a[1] * b[0]]

        pos = [None] * NUM_JOINTS     # per joint: 3 tiles of (8, 128)
        # gR[j][k] = column k of joint j's world rotation (list of 3 tiles),
        # only for the columns actually consumed downstream.
        gR = [None] * NUM_JOINTS

        for j in range(NUM_JOINTS):
            parent = PARENTS[j]
            cols_needed = NEEDED_COLS[j]

            # compute_rotation_matrix_from_ortho6d (Zhou et al.), column-pruned:
            # x = norm(x_raw); z = norm(x ⨯ y_raw); y = z ⨯ x.
            local = [None, None, None]
            if cols_needed:
                base = ROT_BASE[j]
                x_raw = [ld(rot_ref, base + c) for c in range(3)]
                x = normalize(x_raw)
                local[0] = x
                if (1 in cols_needed) or (2 in cols_needed):
                    y_raw = [ld(rot_ref, base + 3 + c) for c in range(3)]
                    z = normalize(cross(x, y_raw))
                    local[2] = z
                    if 1 in cols_needed:
                        local[1] = cross(z, x)

            if parent == -1:
                pos[j] = [ld(root_ref, c) for c in range(3)]
                gR[j] = [local[k] if k in cols_needed else None
                         for k in range(3)]
            else:
                # T-pose bone offset: t_pose_operators[j] * bones_length[j-1]
                blen = ld(bones_ref, j - 1)
                op = T_POSE_OPERATORS[j]
                off = [None, None, None]
                for k in range(3):
                    if op[k] != 0.0:
                        off[k] = blen if op[k] == 1.0 else op[k] * blen

                Rp = gR[parent]             # parent columns needed are present
                # pos[j] = pos[parent] + R_world[parent] @ bone_offset
                pj = []
                for i in range(3):
                    acc = pos[parent][i]
                    for k in range(3):
                        if off[k] is not None:
                            acc = acc + Rp[k][i] * off[k]
                    pj.append(acc)
                pos[j] = pj

                # R_world[j][:, k] = R_world[parent] @ R_local[j][:, k],
                # only for the columns consumed downstream.
                if cols_needed:
                    gcols = [None, None, None]
                    for k in cols_needed:
                        lk = local[k]
                        gcols[k] = [Rp[0][i] * lk[0]
                                    + Rp[1][i] * lk[1]
                                    + Rp[2][i] * lk[2] for i in range(3)]
                    gR[j] = gcols

            # lane-dense, unmasked (8,128) stores straight into the output slab
            for c in range(3):
                out_ref[j * 3 + c, sl, :] = pos[j][c]


# ----------------------------------------------------------------------------
# Wrapper
# ----------------------------------------------------------------------------
def _default_sub_block():
    """Per-generation batch super-tile: 512 sublanes (64K samples/step) on
    128-MiB-VMEM chips (v5e/v6e), 256 on v7x (64 MiB VMEM)."""
    try:
        vmem_bytes = pltpu.get_tpu_info().vmem_capacity_bytes
    except Exception:
        vmem_bytes = 64 * 1024 * 1024          # conservative (v7x-sized)
    return 512 if vmem_bytes > 96 * 1024 * 1024 else 256


def pose_decoder(rotations_repr, bones_lengths_repr, root_positions, *,
                 sub_block=None):
    """PoseDecoder.forward.

    rotations_repr     : (BL, J, 6)      f32
    bones_lengths_repr : (B, NUM_BONES)  f32
    root_positions     : (BL, 3)         f32
    returns pose       : (BL, J, 3)      f32
    """
    BL, J, D = rotations_repr.shape
    assert J == NUM_JOINTS and D == ROT_REP_DIM
    B, NB = bones_lengths_repr.shape
    assert NB == NUM_BONES and BL % B == 0
    L = BL // B
    f32 = jnp.float32

    if sub_block is None:
        sub_block = _default_sub_block()
    sub_block = max(STRIP, _round_up(sub_block, STRIP))

    # --- pick grid steps / block height ---------------------------------
    nb = _cdiv(BL, LANE)                       # number of 128-lane groups
    n_steps = max(1, _cdiv(nb, sub_block))
    if n_steps < 2 and nb >= 2 * STRIP:
        n_steps = 2                            # keep both v7x TensorCores fed
    if n_steps > 1 and n_steps % 2 == 1:
        n_steps += 1                           # even split across two cores
    sub = _round_up(_cdiv(nb, n_steps), STRIP)
    nb_pad = sub * n_steps
    BL_pad = nb_pad * LANE
    pad = BL_pad - BL

    # TODO(synk): the remaining relayout (two input transposes + the final
    # output un-transpose) still costs one extra HBM pass each way; keeping a
    # channel-major (C, nb, 128) layout end-to-end in the surrounding model
    # would remove it entirely.  allow_input_fusion below lets XLA fold the
    # input side into the kernel operands where it can.
    def to_slab(x_bl_c):                       # (BL, C) -> (C, nb_pad, 128)
        c = x_bl_c.shape[1]
        xp = jnp.pad(x_bl_c.astype(f32), ((0, pad), (0, 0)))
        return jnp.transpose(xp, (1, 0)).reshape(c, nb_pad, LANE)

    # Only child-bearing joints' rotations are ever read by the kernel.
    if CHILD_JOINTS == tuple(range(CHILD_JOINTS[0], CHILD_JOINTS[-1] + 1)):
        rot_used = rotations_repr[:, CHILD_JOINTS[0]:CHILD_JOINTS[-1] + 1, :]
    else:
        rot_used = jnp.concatenate(
            [rotations_repr[:, j:j + 1, :] for j in CHILD_JOINTS], axis=1)
    rot_slab = to_slab(rot_used.reshape(BL, NUM_ROT_CH))   # (18, nb_pad, 128)
    root_slab = to_slab(root_positions)                    # (3,  nb_pad, 128)

    # _compute_bones_length: each batch row repeated L consecutive times along
    # the flattened axis.  broadcast_to (not jnp.repeat) so XLA fuses the
    # expansion into the pad/reshape instead of materializing (NB, BL) twice.
    bones_t = jnp.broadcast_to(
        jnp.transpose(bones_lengths_repr.astype(f32), (1, 0))[:, :, None],
        (NB, B, L)).reshape(NB, BL)
    bones_slab = jnp.pad(bones_t, ((0, 0), (0, pad))).reshape(NB, nb_pad, LANE)

    def spec(ch):
        return pl.BlockSpec((ch, sub, LANE), lambda i: (0, i, 0))

    # VMEM budget: double-buffered channel-major blocks for all operands.
    ch_total = NUM_ROT_CH + NB + 3 + NUM_JOINTS * 3
    step_bytes = ch_total * sub * LANE * 4
    vmem_limit = int(min(96 * 1024 * 1024,
                         max(32 * 1024 * 1024, 2 * step_bytes + (16 << 20))))

    # TODO(synk): on v7x, verify the "parallel" axis actually splits across
    # both TensorCores; if one TC idles in the profile, switch this axis to
    # pltpu.CORE_PARALLEL (or an explicit core_map with a leading core axis).
    out = pl.pallas_call(
        pose_decoder_kernel,
        out_shape=jax.ShapeDtypeStruct((NUM_JOINTS * 3, nb_pad, LANE), f32),
        grid_spec=pltpu.PrefetchScalarGridSpec(
            num_scalar_prefetch=0,
            grid=(n_steps,),
            in_specs=[spec(NUM_ROT_CH), spec(NB), spec(3)],
            out_specs=spec(NUM_JOINTS * 3),
        ),
        compiler_params=pltpu.CompilerParams(
            dimension_semantics=("parallel",),          # megacore split
            vmem_limit_bytes=vmem_limit,
            allow_input_fusion=[True, True, True],
        ),
    )(rot_slab, bones_slab, root_slab)

    # (15, nb_pad, 128) -> strip padding -> (BL, J, 3)
    pose = jnp.transpose(out.reshape(NUM_JOINTS * 3, BL_pad)[:, :BL], (1, 0))
    return pose.reshape(BL, NUM_JOINTS, 3)


# ----------------------------------------------------------------------------
# Pure-JAX reference (mirrors the PyTorch module) for validation
# ----------------------------------------------------------------------------
def _reference(rotations_repr, bones_lengths_repr, root_positions):
    BL = rotations_repr.shape[0]
    B = bones_lengths_repr.shape[0]
    L = BL // B
    bones = jnp.repeat(bones_lengths_repr.astype(jnp.float32), L, axis=0)  # (BL, NB)

    r = rotations_repr.astype(jnp.float32).reshape(BL * NUM_JOINTS, 6)
    x_raw, y_raw = r[:, :3], r[:, 3:]

    def norm(v):
        m = jnp.maximum(jnp.linalg.norm(v, axis=-1, keepdims=True), EPS)
        return v / m

    x = norm(x_raw)
    z = norm(jnp.cross(x, y_raw))
    y = jnp.cross(z, x)
    R = jnp.stack([x, y, z], axis=-1).reshape(BL, NUM_JOINTS, 3, 3)

    ops = jnp.asarray(T_POSE_OPERATORS, jnp.float32)
    pos = [None] * NUM_JOINTS
    gR = [None] * NUM_JOINTS
    pos[0] = root_positions.astype(jnp.float32)
    gR[0] = R[:, 0]
    for j in range(1, NUM_JOINTS):
        p = PARENTS[j]
        off = ops[j][None, :] * bones[:, j - 1:j]
        pos[j] = pos[p] + jnp.einsum("bij,bj->bi", gR[p], off)
        gR[j] = jnp.einsum("bij,bjk->bik", gR[p], R[:, j])
    return jnp.stack(pos, axis=1)                               # (BL, J, 3)


if __name__ == "__main__":
    key = jax.random.PRNGKey(0)
    B, L = 2, 4
    BL = B * L
    k1, k2, k3 = jax.random.split(key, 3)
    rotations_repr = jax.random.normal(k1, (BL, NUM_JOINTS, ROT_REP_DIM), jnp.float32)
    bones_lengths_repr = jax.random.uniform(
        k2, (B, NUM_BONES), jnp.float32, minval=0.5, maxval=1.5)
    root_positions = jax.random.normal(k3, (BL, 3), jnp.float32)

    pose = pose_decoder(rotations_repr, bones_lengths_repr, root_positions)
    pose = jax.block_until_ready(pose)
    assert pose.shape == (BL, NUM_JOINTS, 3)

    ref = _reference(rotations_repr, bones_lengths_repr, root_positions)
    max_err = float(jnp.max(jnp.abs(pose - ref)))
    assert jnp.allclose(pose, ref, atol=1e-4, rtol=1e-4), max_err
    print("KERNEL_OK")
</pallas_src>

<mosaic_0001>
module attributes {stable_mosaic.version = 11 : i64} {
  func.func @pose_decoder_kernel(%arg0: i32, %arg1: memref<18x8x128xf32, #tpu.memory_space<vmem>>, %arg2: memref<4x8x128xf32, #tpu.memory_space<vmem>>, %arg3: memref<3x8x128xf32, #tpu.memory_space<vmem>>, %arg4: memref<15x8x128xf32, #tpu.memory_space<vmem>>) attributes {dimension_semantics = [#tpu.dimension_semantics<parallel>], iteration_bounds = array<i64: 1>, scalar_prefetch = 0 : i64, scratch_operands = 0 : i64, tpu.core_type = #tpu.core_type<tc>, window_params = [{transform_indices = @transform_0, window_bounds = array<i64: 18, 8, 128>}, {transform_indices = @transform_1, window_bounds = array<i64: 4, 8, 128>}, {transform_indices = @transform_2, window_bounds = array<i64: 3, 8, 128>}, {transform_indices = @transform_3, window_bounds = array<i64: 15, 8, 128>}]} {
    %c0_i32 = arith.constant 0 : i32
    %c1_i32 = arith.constant 1 : i32
    %0 = arith.muli %c0_i32, %c1_i32 : i32
    %c0_i32_0 = arith.constant 0 : i32
    %1 = arith.addi %c0_i32_0, %0 : i32
    %c8_i32 = arith.constant 8 : i32
    %2 = arith.muli %1, %c8_i32 : i32
    %3 = tpu.assume_multiple %2, 8 : i32
    %c0 = arith.constant 0 : index
    %4 = arith.index_cast %3 : i32 to index
    %c0_1 = arith.constant 0 : index
    %5 = vector.load %arg1[%c0, %4, %c0_1] : memref<18x8x128xf32, #tpu.memory_space<vmem>>, vector<1x8x128xf32>
    %6 = vector.shape_cast %5 : vector<1x8x128xf32> to vector<8x128xf32>
    %c1 = arith.constant 1 : index
    %7 = arith.index_cast %3 : i32 to index
    %c0_2 = arith.constant 0 : index
    %8 = vector.load %arg1[%c1, %7, %c0_2] : memref<18x8x128xf32, #tpu.memory_space<vmem>>, vector<1x8x128xf32>
    %9 = vector.shape_cast %8 : vector<1x8x128xf32> to vector<8x128xf32>
    %c2 = arith.constant 2 : index
    %10 = arith.index_cast %3 : i32 to index
    %c0_3 = arith.constant 0 : index
    %11 = vector.load %arg1[%c2, %10, %c0_3] : memref<18x8x128xf32, #tpu.memory_space<vmem>>, vector<1x8x128xf32>
    %12 = vector.shape_cast %11 : vector<1x8x128xf32> to vector<8x128xf32>
    %13 = arith.mulf %6, %6 : vector<8x128xf32>
    %14 = arith.mulf %9, %9 : vector<8x128xf32>
    %15 = arith.addf %13, %14 : vector<8x128xf32>
    %16 = arith.mulf %12, %12 : vector<8x128xf32>
    %17 = arith.addf %15, %16 : vector<8x128xf32>
    %cst = arith.constant 1.000000e-16 : f32
    %18 = vector.broadcast %cst : f32 to vector<8x128xf32>
    %19 = arith.maximumf %17, %18 : vector<8x128xf32>
    %20 = math.rsqrt %19 : vector<8x128xf32>
    %21 = arith.mulf %6, %20 : vector<8x128xf32>
    %22 = arith.mulf %9, %20 : vector<8x128xf32>
    %23 = arith.mulf %12, %20 : vector<8x128xf32>
    %c3 = arith.constant 3 : index
    %24 = arith.index_cast %3 : i32 to index
    %c0_4 = arith.constant 0 : index
    %25 = vector.load %arg1[%c3, %24, %c0_4] : memref<18x8x128xf32, #tpu.memory_space<vmem>>, vector<1x8x128xf32>
    %26 = vector.shape_cast %25 : vector<1x8x128xf32> to vector<8x128xf32>
    %c4 = arith.constant 4 : index
    %27 = arith.index_cast %3 : i32 to index
    %c0_5 = arith.constant 0 : index
    %28 = vector.load %arg1[%c4, %27, %c0_5] : memref<18x8x128xf32, #tpu.memory_space<vmem>>, vector<1x8x128xf32>
    %29 = vector.shape_cast %28 : vector<1x8x128xf32> to vector<8x128xf32>
    %c5 = arith.constant 5 : index
    %30 = arith.index_cast %3 : i32 to index
    %c0_6 = arith.constant 0 : index
    %31 = vector.load %arg1[%c5, %30, %c0_6] : memref<18x8x128xf32, #tpu.memory_space<vmem>>, vector<1x8x128xf32>
    %32 = vector.shape_cast %31 : vector<1x8x128xf32> to vector<8x128xf32>
    %33 = arith.mulf %22, %32 : vector<8x128xf32>
    %34 = arith.mulf %23, %29 : vector<8x128xf32>
    %35 = arith.subf %33, %34 : vector<8x128xf32>
    %36 = arith.mulf %23, %26 : vector<8x128xf32>
    %37 = arith.mulf %21, %32 : vector<8x128xf32>
    %38 = arith.subf %36, %37 : vector<8x128xf32>
    %39 = arith.mulf %21, %29 : vector<8x128xf32>
    %40 = arith.mulf %22, %26 : vector<8x128xf32>
    %41 = arith.subf %39, %40 : vector<8x128xf32>
    %42 = arith.mulf %35, %35 : vector<8x128xf32>
    %43 = arith.mulf %38, %38 : vector<8x128xf32>
    %44 = arith.addf %42, %43 : vector<8x128xf32>
    %45 = arith.mulf %41, %41 : vector<8x128xf32>
    %46 = arith.addf %44, %45 : vector<8x128xf32>
    %cst_7 = arith.constant 1.000000e-16 : f32
    %47 = vector.broadcast %cst_7 : f32 to vector<8x128xf32>
    %48 = arith.maximumf %46, %47 : vector<8x128xf32>
    %49 = math.rsqrt %48 : vector<8x128xf32>
    %50 = arith.mulf %35, %49 : vector<8x128xf32>
    %51 = arith.mulf %38, %49 : vector<8x128xf32>
    %52 = arith.mulf %41, %49 : vector<8x128xf32>
    %53 = arith.mulf %51, %23 : vector<8x128xf32>
    %54 = arith.mulf %52, %22 : vector<8x128xf32>
    %55 = arith.subf %53, %54 : vector<8x128xf32>
    %56 = arith.mulf %52, %21 : vector<8x128xf32>
    %57 = arith.mulf %50, %23 : vector<8x128xf32>
    %58 = arith.subf %56, %57 : vector<8x128xf32>
    %59 = arith.mulf %50, %22 : vector<8x128xf32>
    %60 = arith.mulf %51, %21 : vector<8x128xf32>
    %61 = arith.subf %59, %60 : vector<8x128xf32>
    %c0_8 = arith.constant 0 : index
    %62 = arith.index_cast %3 : i32 to index
    %c0_9 = arith.constant 0 : index
    %63 = vector.load %arg3[%c0_8, %62, %c0_9] : memref<3x8x128xf32, #tpu.memory_space<vmem>>, vector<1x8x128xf32>
    %64 = vector.shape_cast %63 : vector<1x8x128xf32> to vector<8x128xf32>
    %c1_10 = arith.constant 1 : index
    %65 = arith.index_cast %3 : i32 to index
    %c0_11 = arith.constant 0 : index
    %66 = vector.load %arg3[%c1_10, %65, %c0_11] : memref<3x8x128xf32, #tpu.memory_space<vmem>>, vector<1x8x128xf32>
    %67 = vector.shape_cast %66 : vector<1x8x128xf32> to vector<8x128xf32>
    %c2_12 = arith.constant 2 : index
    %68 = arith.index_cast %3 : i32 to index
    %c0_13 = arith.constant 0 : index
    %69 = vector.load %arg3[%c2_12, %68, %c0_13] : memref<3x8x128xf32, #tpu.memory_space<vmem>>, vector<1x8x128xf32>
    %70 = vector.shape_cast %69 : vector<1x8x128xf32> to vector<8x128xf32>
    %c0_14 = arith.constant 0 : index
    %71 = arith.index_cast %3 : i32 to index
    %c0_15 = arith.constant 0 : index
    %72 = vector.load %arg4[%c0_14, %71, %c0_15] : memref<15x8x128xf32, #tpu.memory_space<vmem>>, vector<1x8x128xf32>
    %73 = vector.shape_cast %72 : vector<1x8x128xf32> to vector<8x128xf32>
    %74 = vector.shape_cast %64 : vector<8x128xf32> to vector<1x8x128xf32>
    tpu.vector_store %arg4[%c0_14, %71, %c0_15], %74 {strides = array<i32>} : memref<15x8x128xf32, #tpu.memory_space<vmem>>, vector<1x8x128xf32>,
    %c1_16 = arith.constant 1 : index
    %75 = arith.index_cast %3 : i32 to index
    %c0_17 = arith.constant 0 : index
    %76 = vector.load %arg4[%c1_16, %75, %c0_17] : memref<15x8x128xf32, #tpu.memory_space<vmem>>, vector<1x8x128xf32>
    %77 = vector.shape_cast %76 : vector<1x8x128xf32> to vector<8x128xf32>
    %78 = vector.shape_cast %67 : vector<8x128xf32> to vector<1x8x128xf32>
    tpu.vector_store %arg4[%c1_16, %75, %c0_17], %78 {strides = array<i32>} : memref<15x8x128xf32, #tpu.memory_space<vmem>>, vector<1x8x128xf32>,
    %c2_18 = arith.constant 2 : index
    %79 = arith.index_cast %3 : i32 to index
    %c0_19 = arith.constant 0 : index
    %80 = vector.load %arg4[%c2_18, %79, %c0_19] : memref<15x8x128xf32, #tpu.memory_space<vmem>>, vector<1x8x128xf32>
    %81 = vector.shape_cast %80 : vector<1x8x128xf32> to vector<8x128xf32>
    %82 = vector.shape_cast %70 : vector<8x128xf32> to vector<1x8x128xf32>
    tpu.vector_store %arg4[%c2_18, %79, %c0_19], %82 {strides = array<i32>} : memref<15x8x128xf32, #tpu.memory_space<vmem>>, vector<1x8x128xf32>,
    %c6 = arith.constant 6 : index
    %83 = arith.index_cast %3 : i32 to index
    %c0_20 = arith.constant 0 : index
    %84 = vector.load %arg1[%c6, %83, %c0_20] : memref<18x8x128xf32, #tpu.memory_space<vmem>>, vector<1x8x128xf32>
    %85 = vector.shape_cast %84 : vector<1x8x128xf32> to vector<8x128xf32>
    %c7 = arith.constant 7 : index
    %86 = arith.index_cast %3 : i32 to index
    %c0_21 = arith.constant 0 : index
    %87 = vector.load %arg1[%c7, %86, %c0_21] : memref<18x8x128xf32, #tpu.memory_space<vmem>>, vector<1x8x128xf32>
    %88 = vector.shape_cast %87 : vector<1x8x128xf32> to vector<8x128xf32>
    %c8 = arith.constant 8 : index
    %89 = arith.index_cast %3 : i32 to index
    %c0_22 = arith.constant 0 : index
    %90 = vector.load %arg1[%c8, %89, %c0_22] : memref<18x8x128xf32, #tpu.memory_space<vmem>>, vector<1x8x128xf32>
    %91 = vector.shape_cast %90 : vector<1x8x128xf32> to vector<8x128xf32>
    %92 = arith.mulf %85, %85 : vector<8x128xf32>
    %93 = arith.mulf %88, %88 : vector<8x128xf32>
    %94 = arith.addf %92, %93 : vector<8x128xf32>
    %95 = arith.mulf %91, %91 : vector<8x128xf32>
    %96 = arith.addf %94, %95 : vector<8x128xf32>
    %cst_23 = arith.constant 1.000000e-16 : f32
    %97 = vector.broadcast %cst_23 : f32 to vector<8x128xf32>
    %98 = arith.maximumf %96, %97 : vector<8x128xf32>
    %99 = math.rsqrt %98 : vector<8x128xf32>
    %100 = arith.mulf %85, %99 : vector<8x128xf32>
    %101 = arith.mulf %88, %99 : vector<8x128xf32>
    %102 = arith.mulf %91, %99 : vector<8x128xf32>
    %c9 = arith.constant 9 : index
    %103 = arith.index_cast %3 : i32 to index
    %c0_24 = arith.constant 0 : index
    %104 = vector.load %arg1[%c9, %103, %c0_24] : memref<18x8x128xf32, #tpu.memory_space<vmem>>, vector<1x8x128xf32>
    %105 = vector.shape_cast %104 : vector<1x8x128xf32> to vector<8x128xf32>
    %c10 = arith.constant 10 : index
    %106 = arith.index_cast %3 : i32 to index
    %c0_25 = arith.constant 0 : index
    %107 = vector.load %arg1[%c10, %106, %c0_25] : memref<18x8x128xf32, #tpu.memory_space<vmem>>, vector<1x8x128xf32>
    %108 = vector.shape_cast %107 : vector<1x8x128xf32> to vector<8x128xf32>
    %c11 = arith.constant 11 : index
    %109 = arith.index_cast %3 : i32 to index
    %c0_26 = arith.constant 0 : index
    %110 = vector.load %arg1[%c11, %109, %c0_26] : memref<18x8x128xf32, #tpu.memory_space<vmem>>, vector<1x8x128xf32>
    %111 = vector.shape_cast %110 : vector<1x8x128xf32> to vector<8x128xf32>
    %112 = arith.mulf %101, %111 : vector<8x128xf32>
    %113 = arith.mulf %102, %108 : vector<8x128xf32>
    %114 = arith.subf %112, %113 : vector<8x128xf32>
    %115 = arith.mulf %102, %105 : vector<8x128xf32>
    %116 = arith.mulf %100, %111 : vector<8x128xf32>
    %117 = arith.subf %115, %116 : vector<8x128xf32>
    %118 = arith.mulf %100, %108 : vector<8x128xf32>
    %119 = arith.mulf %101, %105 : vector<8x128xf32>
    %120 = arith.subf %118, %119 : vector<8x128xf32>
    %121 = arith.mulf %114, %114 : vector<8x128xf32>
    %122 = arith.mulf %117, %117 : vector<8x128xf32>
    %123 = arith.addf %121, %122 : vector<8x128xf32>
    %124 = arith.mulf %120, %120 : vector<8x128xf32>
    %125 = arith.addf %123, %124 : vector<8x128xf32>
    %cst_27 = arith.constant 1.000000e-16 : f32
    %126 = vector.broadcast %cst_27 : f32 to vector<8x128xf32>
    %127 = arith.maximumf %125, %126 : vector<8x128xf32>
    %128 = math.rsqrt %127 : vector<8x128xf32>
    %129 = arith.mulf %114, %128 : vector<8x128xf32>
    %130 = arith.mulf %117, %128 : vector<8x128xf32>
    %131 = arith.mulf %120, %128 : vector<8x128xf32>
    %132 = arith.mulf %130, %102 : vector<8x128xf32>
    %133 = arith.mulf %131, %101 : vector<8x128xf32>
    %134 = arith.subf %132, %133 : vector<8x128xf32>
    %135 = arith.mulf %131, %100 : vector<8x128xf32>
    %136 = arith.mulf %129, %102 : vector<8x128xf32>
    %137 = arith.subf %135, %136 : vector<8x128xf32>
    %138 = arith.mulf %129, %101 : vector<8x128xf32>
    %139 = arith.mulf %130, %100 : vector<8x128xf32>
    %140 = arith.subf %138, %139 : vector<8x128xf32>
    %c0_28 = arith.constant 0 : index
    %141 = arith.index_cast %3 : i32 to index
    %c0_29 = arith.constant 0 : index
    %142 = vector.load %arg2[%c0_28, %141, %c0_29] : memref<4x8x128xf32, #tpu.memory_space<vmem>>, vector<1x8x128xf32>
    %143 = vector.shape_cast %142 : vector<1x8x128xf32> to vector<8x128xf32>
    %144 = arith.mulf %55, %143 : vector<8x128xf32>
    %145 = arith.addf %64, %144 : vector<8x128xf32>
    %146 = arith.mulf %58, %143 : vector<8x128xf32>
    %147 = arith.addf %67, %146 : vector<8x128xf32>
    %148 = arith.mulf %61, %143 : vector<8x128xf32>
    %149 = arith.addf %70, %148 : vector<8x128xf32>
    %150 = arith.mulf %21, %100 : vector<8x128xf32>
    %151 = arith.mulf %55, %101 : vector<8x128xf32>
    %152 = arith.addf %150, %151 : vector<8x128xf32>
    %153 = arith.mulf %50, %102 : vector<8x128xf32>
    %154 = arith.addf %152, %153 : vector<8x128xf32>
    %155 = arith.mulf %22, %100 : vector<8x128xf32>
    %156 = arith.mulf %58, %101 : vector<8x128xf32>
    %157 = arith.addf %155, %156 : vector<8x128xf32>
    %158 = arith.mulf %51, %102 : vector<8x128xf32>
    %159 = arith.addf %157, %158 : vector<8x128xf32>
    %160 = arith.mulf %23, %100 : vector<8x128xf32>
    %161 = arith.mulf %61, %101 : vector<8x128xf32>
    %162 = arith.addf %160, %161 : vector<8x128xf32>
    %163 = arith.mulf %52, %102 : vector<8x128xf32>
    %164 = arith.addf %162, %163 : vector<8x128xf32>
    %165 = arith.mulf %21, %134 : vector<8x128xf32>
    %166 = arith.mulf %55, %137 : vector<8x128xf32>
    %167 = arith.addf %165, %166 : vector<8x128xf32>
    %168 = arith.mulf %50, %140 : vector<8x128xf32>
    %169 = arith.addf %167, %168 : vector<8x128xf32>
    %170 = arith.mulf %22, %134 : vector<8x128xf32>
    %171 = arith.mulf %58, %137 : vector<8x128xf32>
    %172 = arith.addf %170, %171 : vector<8x128xf32>
    %173 = arith.mulf %51, %140 : vector<8x128xf32>
    %174 = arith.addf %172, %173 : vector<8x128xf32>
    %175 = arith.mulf %23, %134 : vector<8x128xf32>
    %176 = arith.mulf %61, %137 : vector<8x128xf32>
    %177 = arith.addf %175, %176 : vector<8x128xf32>
    %178 = arith.mulf %52, %140 : vector<8x128xf32>
    %179 = arith.addf %177, %178 : vector<8x128xf32>
    %180 = arith.mulf %21, %129 : vector<8x128xf32>
    %181 = arith.mulf %55, %130 : vector<8x128xf32>
    %182 = arith.addf %180, %181 : vector<8x128xf32>
    %183 = arith.mulf %50, %131 : vector<8x128xf32>
    %184 = arith.addf %182, %183 : vector<8x128xf32>
    %185 = arith.mulf %22, %129 : vector<8x128xf32>
    %186 = arith.mulf %58, %130 : vector<8x128xf32>
    %187 = arith.addf %185, %186 : vector<8x128xf32>
    %188 = arith.mulf %51, %131 : vector<8x128xf32>
    %189 = arith.addf %187, %188 : vector<8x128xf32>
    %190 = arith.mulf %23, %129 : vector<8x128xf32>
    %191 = arith.mulf %61, %130 : vector<8x128xf32>
    %192 = arith.addf %190, %191 : vector<8x128xf32>
    %193 = arith.mulf %52, %131 : vector<8x128xf32>
    %194 = arith.addf %192, %193 : vector<8x128xf32>
    %c3_30 = arith.constant 3 : index
    %195 = arith.index_cast %3 : i32 to index
    %c0_31 = arith.constant 0 : index
    %196 = vector.load %arg4[%c3_30, %195, %c0_31] : memref<15x8x128xf32, #tpu.memory_space<vmem>>, vector<1x8x128xf32>
    %197 = vector.shape_cast %196 : vector<1x8x128xf32> to vector<8x128xf32>
    %198 = vector.shape_cast %145 : vector<8x128xf32> to vector<1x8x128xf32>
    tpu.vector_store %arg4[%c3_30, %195, %c0_31], %198 {strides = array<i32>} : memref<15x8x128xf32, #tpu.memory_space<vmem>>, vector<1x8x128xf32>,
    %c4_32 = arith.constant 4 : index
    %199 = arith.index_cast %3 : i32 to index
    %c0_33 = arith.constant 0 : index
    %200 = vector.load %arg4[%c4_32, %199, %c0_33] : memref<15x8x128xf32, #tpu.memory_space<vmem>>, vector<1x8x128xf32>
    %201 = vector.shape_cast %200 : vector<1x8x128xf32> to vector<8x128xf32>
    %202 = vector.shape_cast %147 : vector<8x128xf32> to vector<1x8x128xf32>
    tpu.vector_store %arg4[%c4_32, %199, %c0_33], %202 {strides = array<i32>} : memref<15x8x128xf32, #tpu.memory_space<vmem>>, vector<1x8x128xf32>,
    %c5_34 = arith.constant 5 : index
    %203 = arith.index_cast %3 : i32 to index
    %c0_35 = arith.constant 0 : index
    %204 = vector.load %arg4[%c5_34, %203, %c0_35] : memref<15x8x128xf32, #tpu.memory_space<vmem>>, vector<1x8x128xf32>
    %205 = vector.shape_cast %204 : vector<1x8x128xf32> to vector<8x128xf32>
    %206 = vector.shape_cast %149 : vector<8x128xf32> to vector<1x8x128xf32>
    tpu.vector_store %arg4[%c5_34, %203, %c0_35], %206 {strides = array<i32>} : memref<15x8x128xf32, #tpu.memory_space<vmem>>, vector<1x8x128xf32>,
    %c12 = arith.constant 12 : index
    %207 = arith.index_cast %3 : i32 to index
    %c0_36 = arith.constant 0 : index
    %208 = vector.load %arg1[%c12, %207, %c0_36] : memref<18x8x128xf32, #tpu.memory_space<vmem>>, vector<1x8x128xf32>
    %209 = vector.shape_cast %208 : vector<1x8x128xf32> to vector<8x128xf32>
    %c13 = arith.constant 13 : index
    %210 = arith.index_cast %3 : i32 to index
    %c0_37 = arith.constant 0 : index
    %211 = vector.load %arg1[%c13, %210, %c0_37] : memref<18x8x128xf32, #tpu.memory_space<vmem>>, vector<1x8x128xf32>
    %212 = vector.shape_cast %211 : vector<1x8x128xf32> to vector<8x128xf32>
    %c14 = arith.constant 14 : index
    %213 = arith.index_cast %3 : i32 to index
    %c0_38 = arith.constant 0 : index
    %214 = vector.load %arg1[%c14, %213, %c0_38] : memref<18x8x128xf32, #tpu.memory_space<vmem>>, vector<1x8x128xf32>
    %215 = vector.shape_cast %214 : vector<1x8x128xf32> to vector<8x128xf32>
    %216 = arith.mulf %209, %209 : vector<8x128xf32>
    %217 = arith.mulf %212, %212 : vector<8x128xf32>
    %218 = arith.addf %216, %217 : vector<8x128xf32>
    %219 = arith.mulf %215, %215 : vector<8x128xf32>
    %220 = arith.addf %218, %219 : vector<8x128xf32>
    %cst_39 = arith.constant 1.000000e-16 : f32
    %221 = vector.broadcast %cst_39 : f32 to vector<8x128xf32>
    %222 = arith.maximumf %220, %221 : vector<8x128xf32>
    %223 = math.rsqrt %222 : vector<8x128xf32>
    %224 = arith.mulf %209, %223 : vector<8x128xf32>
    %225 = arith.mulf %212, %223 : vector<8x128xf32>
    %226 = arith.mulf %215, %223 : vector<8x128xf32>
    %c15 = arith.constant 15 : index
    %227 = arith.index_cast %3 : i32 to index
    %c0_40 = arith.constant 0 : index
    %228 = vector.load %arg1[%c15, %227, %c0_40] : memref<18x8x128xf32, #tpu.memory_space<vmem>>, vector<1x8x128xf32>
    %229 = vector.shape_cast %228 : vector<1x8x128xf32> to vector<8x128xf32>
    %c16 = arith.constant 16 : index
    %230 = arith.index_cast %3 : i32 to index
    %c0_41 = arith.constant 0 : index
    %231 = vector.load %arg1[%c16, %230, %c0_41] : memref<18x8x128xf32, #tpu.memory_space<vmem>>, vector<1x8x128xf32>
    %232 = vector.shape_cast %231 : vector<1x8x128xf32> to vector<8x128xf32>
    %c17 = arith.constant 17 : index
    %233 = arith.index_cast %3 : i32 to index
    %c0_42 = arith.constant 0 : index
    %234 = vector.load %arg1[%c17, %233, %c0_42] : memref<18x8x128xf32, #tpu.memory_space<vmem>>, vector<1x8x128xf32>
    %235 = vector.shape_cast %234 : vector<1x8x128xf32> to vector<8x128xf32>
    %236 = arith.mulf %225, %235 : vector<8x128xf32>
    %237 = arith.mulf %226, %232 : vector<8x128xf32>
    %238 = arith.subf %236, %237 : vector<8x128xf32>
    %239 = arith.mulf %226, %229 : vector<8x128xf32>
    %240 = arith.mulf %224, %235 : vector<8x128xf32>
    %241 = arith.subf %239, %240 : vector<8x128xf32>
    %242 = arith.mulf %224, %232 : vector<8x128xf32>
    %243 = arith.mulf %225, %229 : vector<8x128xf32>
    %244 = arith.subf %242, %243 : vector<8x128xf32>
    %245 = arith.mulf %238, %238 : vector<8x128xf32>
    %246 = arith.mulf %241, %241 : vector<8x128xf32>
    %247 = arith.addf %245, %246 : vector<8x128xf32>
    %248 = arith.mulf %244, %244 : vector<8x128xf32>
    %249 = arith.addf %247, %248 : vector<8x128xf32>
    %cst_43 = arith.constant 1.000000e-16 : f32
    %250 = vector.broadcast %cst_43 : f32 to vector<8x128xf32>
    %251 = arith.maximumf %249, %250 : vector<8x128xf32>
    %252 = math.rsqrt %251 : vector<8x128xf32>
    %253 = arith.mulf %238, %252 : vector<8x128xf32>
    %254 = arith.mulf %241, %252 : vector<8x128xf32>
    %255 = arith.mulf %244, %252 : vector<8x128xf32>
    %c1_44 = arith.constant 1 : index
    %256 = arith.index_cast %3 : i32 to index
    %c0_45 = arith.constant 0 : index
    %257 = vector.load %arg2[%c1_44, %256, %c0_45] : memref<4x8x128xf32, #tpu.memory_space<vmem>>, vector<1x8x128xf32>
    %258 = vector.shape_cast %257 : vector<1x8x128xf32> to vector<8x128xf32>
    %259 = arith.mulf %154, %258 : vector<8x128xf32>
    %260 = arith.addf %145, %259 : vector<8x128xf32>
    %261 = arith.mulf %159, %258 : vector<8x128xf32>
    %262 = arith.addf %147, %261 : vector<8x128xf32>
    %263 = arith.mulf %164, %258 : vector<8x128xf32>
    %264 = arith.addf %149, %263 : vector<8x128xf32>
    %265 = arith.mulf %154, %253 : vector<8x128xf32>
    %266 = arith.mulf %169, %254 : vector<8x128xf32>
    %267 = arith.addf %265, %266 : vector<8x128xf32>
    %268 = arith.mulf %184, %255 : vector<8x128xf32>
    %269 = arith.addf %267, %268 : vector<8x128xf32>
    %270 = arith.mulf %159, %253 : vector<8x128xf32>
    %271 = arith.mulf %174, %254 : vector<8x128xf32>
    %272 = arith.addf %270, %271 : vector<8x128xf32>
    %273 = arith.mulf %189, %255 : vector<8x128xf32>
    %274 = arith.addf %272, %273 : vector<8x128xf32>
    %275 = arith.mulf %164, %253 : vector<8x128xf32>
    %276 = arith.mulf %179, %254 : vector<8x128xf32>
    %277 = arith.addf %275, %276 : vector<8x128xf32>
    %278 = arith.mulf %194, %255 : vector<8x128xf32>
    %279 = arith.addf %277, %278 : vector<8x128xf32>
    %c6_46 = arith.constant 6 : index
    %280 = arith.index_cast %3 : i32 to index
    %c0_47 = arith.constant 0 : index
    %281 = vector.load %arg4[%c6_46, %280, %c0_47] : memref<15x8x128xf32, #tpu.memory_space<vmem>>, vector<1x8x128xf32>
    %282 = vector.shape_cast %281 : vector<1x8x128xf32> to vector<8x128xf32>
    %283 = vector.shape_cast %260 : vector<8x128xf32> to vector<1x8x128xf32>
    tpu.vector_store %arg4[%c6_46, %280, %c0_47], %283 {strides = array<i32>} : memref<15x8x128xf32, #tpu.memory_space<vmem>>, vector<1x8x128xf32>,
    %c7_48 = arith.constant 7 : index
    %284 = arith.index_cast %3 : i32 to index
    %c0_49 = arith.constant 0 : index
    %285 = vector.load %arg4[%c7_48, %284, %c0_49] : memref<15x8x128xf32, #tpu.memory_space<vmem>>, vector<1x8x128xf32>
    %286 = vector.shape_cast %285 : vector<1x8x128xf32> to vector<8x128xf32>
    %287 = vector.shape_cast %262 : vector<8x128xf32> to vector<1x8x128xf32>
    tpu.vector_store %arg4[%c7_48, %284, %c0_49], %287 {strides = array<i32>} : memref<15x8x128xf32, #tpu.memory_space<vmem>>, vector<1x8x128xf32>,
    %c8_50 = arith.constant 8 : index
    %288 = arith.index_cast %3 : i32 to index
    %c0_51 = arith.constant 0 : index
    %289 = vector.load %arg4[%c8_50, %288, %c0_51] : memref<15x8x128xf32, #tpu.memory_space<vmem>>, vector<1x8x128xf32>
    %290 = vector.shape_cast %289 : vector<1x8x128xf32> to vector<8x128xf32>
    %291 = vector.shape_cast %264 : vector<8x128xf32> to vector<1x8x128xf32>
    tpu.vector_store %arg4[%c8_50, %288, %c0_51], %291 {strides = array<i32>} : memref<15x8x128xf32, #tpu.memory_space<vmem>>, vector<1x8x128xf32>,
    %c2_52 = arith.constant 2 : index
    %292 = arith.index_cast %3 : i32 to index
    %c0_53 = arith.constant 0 : index
    %293 = vector.load %arg2[%c2_52, %292, %c0_53] : memref<4x8x128xf32, #tpu.memory_space<vmem>>, vector<1x8x128xf32>
    %294 = vector.shape_cast %293 : vector<1x8x128xf32> to vector<8x128xf32>
    %295 = arith.mulf %269, %294 : vector<8x128xf32>
    %296 = arith.addf %260, %295 : vector<8x128xf32>
    %297 = arith.mulf %274, %294 : vector<8x128xf32>
    %298 = arith.addf %262, %297 : vector<8x128xf32>
    %299 = arith.mulf %279, %294 : vector<8x128xf32>
    %300 = arith.addf %264, %299 : vector<8x128xf32>
    %c9_54 = arith.constant 9 : index
    %301 = arith.index_cast %3 : i32 to index
    %c0_55 = arith.constant 0 : index
    %302 = vector.load %arg4[%c9_54, %301, %c0_55] : memref<15x8x128xf32, #tpu.memory_space<vmem>>, vector<1x8x128xf32>
    %303 = vector.shape_cast %302 : vector<1x8x128xf32> to vector<8x128xf32>
    %304 = vector.shape_cast %296 : vector<8x128xf32> to vector<1x8x128xf32>
    tpu.vector_store %arg4[%c9_54, %301, %c0_55], %304 {strides = array<i32>} : memref<15x8x128xf32, #tpu.memory_space<vmem>>, vector<1x8x128xf32>,
    %c10_56 = arith.constant 10 : index
    %305 = arith.index_cast %3 : i32 to index
    %c0_57 = arith.constant 0 : index
    %306 = vector.load %arg4[%c10_56, %305, %c0_57] : memref<15x8x128xf32, #tpu.memory_space<vmem>>, vector<1x8x128xf32>
    %307 = vector.shape_cast %306 : vector<1x8x128xf32> to vector<8x128xf32>
    %308 = vector.shape_cast %298 : vector<8x128xf32> to vector<1x8x128xf32>
    tpu.vector_store %arg4[%c10_56, %305, %c0_57], %308 {strides = array<i32>} : memref<15x8x128xf32, #tpu.memory_space<vmem>>, vector<1x8x128xf32>,
    %c11_58 = arith.constant 11 : index
    %309 = arith.index_cast %3 : i32 to index
    %c0_59 = arith.constant 0 : index
    %310 = vector.load %arg4[%c11_58, %309, %c0_59] : memref<15x8x128xf32, #tpu.memory_space<vmem>>, vector<1x8x128xf32>
    %311 = vector.shape_cast %310 : vector<1x8x128xf32> to vector<8x128xf32>
    %312 = vector.shape_cast %300 : vector<8x128xf32> to vector<1x8x128xf32>
    tpu.vector_store %arg4[%c11_58, %309, %c0_59], %312 {strides = array<i32>} : memref<15x8x128xf32, #tpu.memory_space<vmem>>, vector<1x8x128xf32>,
    %c3_60 = arith.constant 3 : index
    %313 = arith.index_cast %3 : i32 to index
    %c0_61 = arith.constant 0 : index
    %314 = vector.load %arg2[%c3_60, %313, %c0_61] : memref<4x8x128xf32, #tpu.memory_space<vmem>>, vector<1x8x128xf32>
    %315 = vector.shape_cast %314 : vector<1x8x128xf32> to vector<8x128xf32>
    %cst_62 = arith.constant -1.000000e+00 : f32
    %316 = vector.broadcast %cst_62 : f32 to vector<8x128xf32>
    %317 = arith.mulf %316, %315 : vector<8x128xf32>
    %318 = arith.mulf %154, %317 : vector<8x128xf32>
    %319 = arith.addf %145, %318 : vector<8x128xf32>
    %320 = arith.mulf %159, %317 : vector<8x128xf32>
    %321 = arith.addf %147, %320 : vector<8x128xf32>
    %322 = arith.mulf %164, %317 : vector<8x128xf32>
    %323 = arith.addf %149, %322 : vector<8x128xf32>
    %c12_63 = arith.constant 12 : index
    %324 = arith.index_cast %3 : i32 to index
    %c0_64 = arith.constant 0 : index
    %325 = vector.load %arg4[%c12_63, %324, %c0_64] : memref<15x8x128xf32, #tpu.memory_space<vmem>>, vector<1x8x128xf32>
    %326 = vector.shape_cast %325 : vector<1x8x128xf32> to vector<8x128xf32>
    %327 = vector.shape_cast %319 : vector<8x128xf32> to vector<1x8x128xf32>
    tpu.vector_store %arg4[%c12_63, %324, %c0_64], %327 {strides = array<i32>} : memref<15x8x128xf32, #tpu.memory_space<vmem>>, vector<1x8x128xf32>,
    %c13_65 = arith.constant 13 : index
    %328 = arith.index_cast %3 : i32 to index
    %c0_66 = arith.constant 0 : index
    %329 = vector.load %arg4[%c13_65, %328, %c0_66] : memref<15x8x128xf32, #tpu.memory_space<vmem>>, vector<1x8x128xf32>
    %330 = vector.shape_cast %329 : vector<1x8x128xf32> to vector<8x128xf32>
    %331 = vector.shape_cast %321 : vector<8x128xf32> to vector<1x8x128xf32>
    tpu.vector_store %arg4[%c13_65, %328, %c0_66], %331 {strides = array<i32>} : memref<15x8x128xf32, #tpu.memory_space<vmem>>, vector<1x8x128xf32>,
    %c14_67 = arith.constant 14 : index
    %332 = arith.index_cast %3 : i32 to index
    %c0_68 = arith.constant 0 : index
    %333 = vector.load %arg4[%c14_67, %332, %c0_68] : memref<15x8x128xf32, #tpu.memory_space<vmem>>, vector<1x8x128xf32>
    %334 = vector.shape_cast %333 : vector<1x8x128xf32> to vector<8x128xf32>
    %335 = vector.shape_cast %323 : vector<8x128xf32> to vector<1x8x128xf32>
    tpu.vector_store %arg4[%c14_67, %332, %c0_68], %335 {strides = array<i32>} : memref<15x8x128xf32, #tpu.memory_space<vmem>>, vector<1x8x128xf32>,
    %c1_i32_69 = arith.constant 1 : i32
    return
  }
  func.func @transform_0(%arg0: i32) -> (i32, i32, i32) {
    %c0_i32 = arith.constant 0 : i32
    %c0_i32_0 = arith.constant 0 : i32
    %c0_i32_1 = arith.constant 0 : i32
    return %c0_i32, %arg0, %c0_i32_0 : i32, i32, i32
  }
  func.func @transform_1(%arg0: i32) -> (i32, i32, i32) {
    %c0_i32 = arith.constant 0 : i32
    %c0_i32_0 = arith.constant 0 : i32
    %c0_i32_1 = arith.constant 0 : i32
    return %c0_i32, %arg0, %c0_i32_0 : i32, i32, i32
  }
  func.func @transform_2(%arg0: i32) -> (i32, i32, i32) {
    %c0_i32 = arith.constant 0 : i32
    %c0_i32_0 = arith.constant 0 : i32
    %c0_i32_1 = arith.constant 0 : i32
    return %c0_i32, %arg0, %c0_i32_0 : i32, i32, i32
  }
  func.func @transform_3(%arg0: i32) -> (i32, i32, i32) {
    %c0_i32 = arith.constant 0 : i32
    %c0_i32_0 = arith.constant 0 : i32
    %c0_i32_1 = arith.constant 0 : i32
    return %c0_i32, %arg0, %c0_i32_0 : i32, i32, i32
  }
}

</mosaic_0001>

<llo_original>
// kernel: tpu_custom_call.1
$region0: #{tpu_custom_call.1}
  #allocation0 [shape = 'u32[]', space=smem, size = 0x4, offset = 0x4, fixed_abs, tag = 'smem constant byte address 0x4 - core index']
  #allocation1 [shape = 'u32[144,128]{1,0:T(1,128)}', space=vmem, size = 0x12000, scoped, tag = 'internal scratch']
  %s0 = inlined_call_operand.hbm [shape: f32[18,8,128], index: 0, kind: input, shape index: {}]
  %s1 = inlined_call_operand.hbm [shape: f32[4,8,128], index: 1, kind: input, shape index: {}]
  %s2 = inlined_call_operand.hbm [shape: f32[3,8,128], index: 2, kind: input, shape index: {}]
  %s3 = inlined_call_operand.hbm [shape: f32[15,8,128], index: 3, kind: output, shape index: {}]
  %s4 = sld [smem:[#allocation0]]
  $region34: #{tpu_custom_call.1} parent=0
    _
  %s6 = ssub.s32 1, %s4
  %s7 = scalar_select 0, %s6, %s4
  $region1: #{tpu_custom_call.1} parent=0
    #allocation2 [shape = 'u8[73728]{0}', space=vmem, size = 0x12000, scoped, tag = 'input window, operand 0, single buffered']
    #allocation3 [shape = 's32[1]{0}', space=sflag, size = 0x4, scoped, tag = 'scoped memory for tpu_custom_call.1']
    #allocation4 [shape = 's32[1]{0}', space=sflag, size = 0x4, scoped, tag = 'scoped memory for tpu_custom_call.1']
    #allocation5 [shape = 'u8[16384]{0}', space=vmem, size = 0x4000, scoped, tag = 'input window, operand 1, single buffered']
    #allocation6 [shape = 's32[1]{0}', space=sflag, size = 0x4, scoped, tag = 'scoped memory for tpu_custom_call.1']
    #allocation7 [shape = 'u8[12288]{0}', space=vmem, size = 0x3000, scoped, tag = 'input window, operand 2, single buffered']
    #allocation8 [shape = 'u8[61440]{0}', space=vmem, size = 0xf000, scoped, tag = 'output window, operand 0, single buffered']
    %8 = vsyncpa [#allocation3], 0
    %9 = vsyncpa [#allocation6], 0
    %10 = vsyncpa [#allocation4], 0
    // Predicated region
    $region2: #{tpu_custom_call.1} parent=1 // pred_check
      _
    $region3: #{tpu_custom_call.1} parent=1 // pred_check_branch
      %12 = sbr.rel (0) target = $region5
    $region4: #{tpu_custom_call.1} parent=1 // pred_region
      %s14 = ssub.s32 2304, 2304
      %15 = vsyncadd [#allocation3], %s14
      %s16 = sshll.u32 [#allocation2], 4
      %s17 = int_to_ptr.vmem [resolvable:$true] %s16
      %22 = dma.hbm_to_vmem [thread:$0]  %s0, 2304, %s17, [#allocation3], 128, 128, 8
    $region5: #{tpu_custom_call.1} parent=1 // pred_fallthru
      _
    // Predicated region
    $region6: #{tpu_custom_call.1} parent=1 // pred_check
      _
    $region7: #{tpu_custom_call.1} parent=1 // pred_check_branch
      %24 = sbr.rel (0) target = $region9
    $region8: #{tpu_custom_call.1} parent=1 // pred_region
      %s26 = ssub.s32 512, 512
      %27 = vsyncadd [#allocation6], %s26
      %s28 = sshll.u32 [#allocation5], 4
      %s29 = int_to_ptr.vmem [resolvable:$true] %s28
      %34 = dma.hbm_to_vmem [thread:$0]  %s1, 512, %s29, [#allocation6], 128, 128, 8
    $region9: #{tpu_custom_call.1} parent=1 // pred_fallthru
      _
    // Predicated region
    $region10: #{tpu_custom_call.1} parent=1 // pred_check
      _
    $region11: #{tpu_custom_call.1} parent=1 // pred_check_branch
      %36 = sbr.rel (0) target = $region13
    $region12: #{tpu_custom_call.1} parent=1 // pred_region
      %s38 = ssub.s32 384, 384
      %39 = vsyncadd [#allocation6], %s38
      %s40 = sshll.u32 [#allocation7], 4
      %s41 = int_to_ptr.vmem [resolvable:$true] %s40
      %46 = dma.hbm_to_vmem [thread:$0]  %s2, 384, %s41, [#allocation6], 128, 128, 8
    $region13: #{tpu_custom_call.1} parent=1 // pred_fallthru
      _
    // Predicated region
    $region14: #{tpu_custom_call.1} parent=1 // pred_check
      _
    $region15: #{tpu_custom_call.1} parent=1 // pred_check_branch
      %48 = sbr.rel (0) target = $region17
    $region16: #{tpu_custom_call.1} parent=1 // pred_region
      %49 = dma.done [#allocation3], 2304
    $region17: #{tpu_custom_call.1} parent=1 // pred_fallthru
      _
    // Predicated region
    $region18: #{tpu_custom_call.1} parent=1 // pred_check
      _
    $region19: #{tpu_custom_call.1} parent=1 // pred_check_branch
      %51 = sbr.rel (0) target = $region21
    $region20: #{tpu_custom_call.1} parent=1 // pred_region
      %52 = dma.done [#allocation6], 512
    $region21: #{tpu_custom_call.1} parent=1 // pred_fallthru
      _
    // Predicated region
    $region22: #{tpu_custom_call.1} parent=1 // pred_check
      _
    $region23: #{tpu_custom_call.1} parent=1 // pred_check_branch
      %54 = sbr.rel (0) target = $region25
    $region24: #{tpu_custom_call.1} parent=1 // pred_region
      %55 = dma.done [#allocation6], 384
    $region25: #{tpu_custom_call.1} parent=1 // pred_fallthru
      _
    %v56 = vld [vmem:[#allocation2] sm:$0xff]
    %s57 = sadd.s32 0, 8
    %s58 = scalar_lea.vmem [#allocation2], %s57
    %v59 = vld [vmem:[%s58] sm:$0xff]
    %s60 = sadd.s32 0, 16
    %s61 = scalar_lea.vmem [#allocation2], %s60
    %v62 = vld [vmem:[%s61] sm:$0xff]
    %v63 = vmul.f32 %v56, %v56
    %v64 = vmul.f32 %v59, %v59
    %v65 = vadd.f32 %v63, %v64
    %v66 = vmul.f32 %v62, %v62
    %v67 = vadd.f32 %v65, %v66
    %v68 = vmax.f32 %v67, 1e-16
    %v69 = vrsqrt.pop %v68
    %v70 = vmul.f32 %v56, %v69
    %v71 = vmul.f32 %v59, %v69
    %v72 = vmul.f32 %v62, %v69
    %s73 = sadd.s32 0, 24
    %s74 = scalar_lea.vmem [#allocation2], %s73
    %v75 = vld [vmem:[%s74] sm:$0xff]
    %s76 = sadd.s32 0, 32
    %s77 = scalar_lea.vmem [#allocation2], %s76
    %v78 = vld [vmem:[%s77] sm:$0xff]
    %s79 = sadd.s32 0, 40
    %s80 = scalar_lea.vmem [#allocation2], %s79
    %v81 = vld [vmem:[%s80] sm:$0xff]
    %v82 = vmul.f32 %v71, %v81
    %v83 = vmul.f32 %v72, %v78
    %v84 = vsub.f32 %v82, %v83
    %v85 = vmul.f32 %v72, %v75
    %v86 = vmul.f32 %v70, %v81
    %v87 = vsub.f32 %v85, %v86
    %v88 = vmul.f32 %v70, %v78
    %v89 = vmul.f32 %v71, %v75
    %v90 = vsub.f32 %v88, %v89
    %v91 = vmul.f32 %v84, %v84
    %v92 = vmul.f32 %v87, %v87
    %v93 = vadd.f32 %v91, %v92
    %v94 = vmul.f32 %v90, %v90
    %v95 = vadd.f32 %v93, %v94
    %v96 = vmax.f32 %v95, 1e-16
    %v97 = vrsqrt.pop %v96
    %v98 = vmul.f32 %v84, %v97
    %v99 = vmul.f32 %v87, %v97
    %v100 = vmul.f32 %v90, %v97
    %v101 = vmul.f32 %v99, %v72
    %v102 = vmul.f32 %v100, %v71
    %v103 = vsub.f32 %v101, %v102
    %v104 = vmul.f32 %v100, %v70
    %v105 = vmul.f32 %v98, %v72
    %v106 = vsub.f32 %v104, %v105
    %v107 = vmul.f32 %v98, %v71
    %v108 = vmul.f32 %v99, %v70
    %v109 = vsub.f32 %v107, %v108
    %v110 = vld [vmem:[#allocation7] sm:$0xff]
    %s111 = scalar_lea.vmem [#allocation7], %s57
    %v112 = vld [vmem:[%s111] sm:$0xff]
    %s113 = scalar_lea.vmem [#allocation7], %s60
    %v114 = vld [vmem:[%s113] sm:$0xff]
    %115 = vst [vmem:[#allocation8] sm:$0xff] %v110
    %s116 = scalar_lea.vmem [#allocation8], %s57
    %117 = vst [vmem:[%s116] sm:$0xff] %v112
    %s118 = scalar_lea.vmem [#allocation8], %s60
    %119 = vst [vmem:[%s118] sm:$0xff] %v114
    %s120 = sadd.s32 0, 48
    %s121 = scalar_lea.vmem [#allocation2], %s120
    %v122 = vld [vmem:[%s121] sm:$0xff]
    %s123 = sadd.s32 0, 56
    %s124 = scalar_lea.vmem [#allocation2], %s123
    %v125 = vld [vmem:[%s124] sm:$0xff]
    %s126 = sadd.s32 0, 64
    %s127 = scalar_lea.vmem [#allocation2], %s126
    %v128 = vld [vmem:[%s127] sm:$0xff]
    %v129 = vmul.f32 %v122, %v122
    %v130 = vmul.f32 %v125, %v125
    %v131 = vadd.f32 %v129, %v130
    %v132 = vmul.f32 %v128, %v128
    %v133 = vadd.f32 %v131, %v132
    %v134 = vmax.f32 %v133, 1e-16
    %v135 = vrsqrt.pop %v134
    %v136 = vmul.f32 %v122, %v135
    %v137 = vmul.f32 %v125, %v135
    %v138 = vmul.f32 %v128, %v135
    %s139 = sadd.s32 0, 72
    %s140 = scalar_lea.vmem [#allocation2], %s139
    %v141 = vld [vmem:[%s140] sm:$0xff]
    %s142 = sadd.s32 0, 80
    %s143 = scalar_lea.vmem [#allocation2], %s142
    %v144 = vld [vmem:[%s143] sm:$0xff]
    %s145 = sadd.s32 0, 88
    %s146 = scalar_lea.vmem [#allocation2], %s145
    %v147 = vld [vmem:[%s146] sm:$0xff]
    %v148 = vmul.f32 %v137, %v147
    %v149 = vmul.f32 %v138, %v144
    %v150 = vsub.f32 %v148, %v149
    %v151 = vmul.f32 %v138, %v141
    %v152 = vmul.f32 %v136, %v147
    %v153 = vsub.f32 %v151, %v152
    %v154 = vmul.f32 %v136, %v144
    %v155 = vmul.f32 %v137, %v141
    %v156 = vsub.f32 %v154, %v155
    %v157 = vmul.f32 %v150, %v150
    %v158 = vmul.f32 %v153, %v153
    %v159 = vadd.f32 %v157, %v158
    %v160 = vmul.f32 %v156, %v156
    %v161 = vadd.f32 %v159, %v160
    %v162 = vmax.f32 %v161, 1e-16
    %v163 = vrsqrt.pop %v162
    %v164 = vmul.f32 %v150, %v163
    %v165 = vmul.f32 %v153, %v163
    %v166 = vmul.f32 %v156, %v163
    %v167 = vmul.f32 %v165, %v138
    %v168 = vmul.f32 %v166, %v137
    %v169 = vsub.f32 %v167, %v168
    %v170 = vmul.f32 %v166, %v136
    %v171 = vmul.f32 %v164, %v138
    %v172 = vsub.f32 %v170, %v171
    %v173 = vmul.f32 %v164, %v137
    %v174 = vmul.f32 %v165, %v136
    %v175 = vsub.f32 %v173, %v174
    %v176 = vld [vmem:[#allocation5] sm:$0xff]
    %v177 = vmul.f32 %v103, %v176
    %v178 = vadd.f32 %v110, %v177
    %v179 = vmul.f32 %v106, %v176
    %v180 = vadd.f32 %v112, %v179
    %v181 = vmul.f32 %v109, %v176
    %v182 = vadd.f32 %v114, %v181
    %v183 = vmul.f32 %v70, %v136
    %v184 = vmul.f32 %v103, %v137
    %v185 = vadd.f32 %v183, %v184
    %v186 = vmul.f32 %v98, %v138
    %v187 = vadd.f32 %v185, %v186
    %v188 = vmul.f32 %v71, %v136
    %v189 = vmul.f32 %v106, %v137
    %v190 = vadd.f32 %v188, %v189
    %v191 = vmul.f32 %v99, %v138
    %v192 = vadd.f32 %v190, %v191
    %v193 = vmul.f32 %v72, %v136
    %v194 = vmul.f32 %v109, %v137
    %v195 = vadd.f32 %v193, %v194
    %v196 = vmul.f32 %v100, %v138
    %v197 = vadd.f32 %v195, %v196
    %v198 = vmul.f32 %v70, %v169
    %v199 = vmul.f32 %v103, %v172
    %v200 = vadd.f32 %v198, %v199
    %v201 = vmul.f32 %v98, %v175
    %v202 = vadd.f32 %v200, %v201
    %v203 = vmul.f32 %v71, %v169
    %v204 = vmul.f32 %v106, %v172
    %v205 = vadd.f32 %v203, %v204
    %v206 = vmul.f32 %v99, %v175
    %v207 = vadd.f32 %v205, %v206
    %v208 = vmul.f32 %v72, %v169
    %v209 = vmul.f32 %v109, %v172
    %v210 = vadd.f32 %v208, %v209
    %v211 = vmul.f32 %v100, %v175
    %v212 = vadd.f32 %v210, %v211
    %v213 = vmul.f32 %v70, %v164
    %v214 = vmul.f32 %v103, %v165
    %v215 = vadd.f32 %v213, %v214
    %v216 = vmul.f32 %v98, %v166
    %v217 = vadd.f32 %v215, %v216
    %v218 = vmul.f32 %v71, %v164
    %v219 = vmul.f32 %v106, %v165
    %v220 = vadd.f32 %v218, %v219
    %v221 = vmul.f32 %v99, %v166
    %v222 = vadd.f32 %v220, %v221
    %v223 = vmul.f32 %v72, %v164
    %v224 = vmul.f32 %v109, %v165
    %v225 = vadd.f32 %v223, %v224
    %v226 = vmul.f32 %v100, %v166
    %v227 = vadd.f32 %v225, %v226
    %s228 = scalar_lea.vmem [#allocation8], %s73
    %229 = vst [vmem:[%s228] sm:$0xff] %v178
    %s230 = scalar_lea.vmem [#allocation8], %s76
    %231 = vst [vmem:[%s230] sm:$0xff] %v180
    %s232 = scalar_lea.vmem [#allocation8], %s79
    %233 = vst [vmem:[%s232] sm:$0xff] %v182
    %s234 = sadd.s32 0, 96
    %s235 = scalar_lea.vmem [#allocation2], %s234
    %v236 = vld [vmem:[%s235] sm:$0xff]
    %s237 = sadd.s32 0, 104
    %s238 = scalar_lea.vmem [#allocation2], %s237
    %v239 = vld [vmem:[%s238] sm:$0xff]
    %s240 = sadd.s32 0, 112
    %s241 = scalar_lea.vmem [#allocation2], %s240
    %v242 = vld [vmem:[%s241] sm:$0xff]
    %v243 = vmul.f32 %v236, %v236
    %v244 = vmul.f32 %v239, %v239
    %v245 = vadd.f32 %v243, %v244
    %v246 = vmul.f32 %v242, %v242
    %v247 = vadd.f32 %v245, %v246
    %v248 = vmax.f32 %v247, 1e-16
    %v249 = vrsqrt.pop %v248
    %v250 = vmul.f32 %v236, %v249
    %v251 = vmul.f32 %v239, %v249
    %v252 = vmul.f32 %v242, %v249
    %s253 = sadd.s32 0, 120
    %s254 = scalar_lea.vmem [#allocation2], %s253
    %v255 = vld [vmem:[%s254] sm:$0xff]
    %s256 = sadd.s32 0, 128
    %s257 = scalar_lea.vmem [#allocation2], %s256
    %v258 = vld [vmem:[%s257] sm:$0xff]
    %s259 = sadd.s32 0, 136
    %s260 = scalar_lea.vmem [#allocation2], %s259
    %v261 = vld [vmem:[%s260] sm:$0xff]
    %v262 = vmul.f32 %v251, %v261
    %v263 = vmul.f32 %v252, %v258
    %v264 = vsub.f32 %v262, %v263
    %v265 = vmul.f32 %v252, %v255
    %v266 = vmul.f32 %v250, %v261
    %v267 = vsub.f32 %v265, %v266
    %v268 = vmul.f32 %v250, %v258
    %v269 = vmul.f32 %v251, %v255
    %v270 = vsub.f32 %v268, %v269
    %v271 = vmul.f32 %v264, %v264
    %v272 = vmul.f32 %v267, %v267
    %v273 = vadd.f32 %v271, %v272
    %v274 = vmul.f32 %v270, %v270
    %v275 = vadd.f32 %v273, %v274
    %v276 = vmax.f32 %v275, 1e-16
    %v277 = vrsqrt.pop %v276
    %v278 = vmul.f32 %v264, %v277
    %v279 = vmul.f32 %v267, %v277
    %v280 = vmul.f32 %v270, %v277
    %s281 = scalar_lea.vmem [#allocation5], %s57
    %v282 = vld [vmem:[%s281] sm:$0xff]
    %v283 = vmul.f32 %v187, %v282
    %v284 = vadd.f32 %v178, %v283
    %v285 = vmul.f32 %v192, %v282
    %v286 = vadd.f32 %v180, %v285
    %v287 = vmul.f32 %v197, %v282
    %v288 = vadd.f32 %v182, %v287
    %v289 = vmul.f32 %v187, %v278
    %v290 = vmul.f32 %v202, %v279
    %v291 = vadd.f32 %v289, %v290
    %v292 = vmul.f32 %v217, %v280
    %v293 = vadd.f32 %v291, %v292
    %v294 = vmul.f32 %v192, %v278
    %v295 = vmul.f32 %v207, %v279
    %v296 = vadd.f32 %v294, %v295
    %v297 = vmul.f32 %v222, %v280
    %v298 = vadd.f32 %v296, %v297
    %v299 = vmul.f32 %v197, %v278
    %v300 = vmul.f32 %v212, %v279
    %v301 = vadd.f32 %v299, %v300
    %v302 = vmul.f32 %v227, %v280
    %v303 = vadd.f32 %v301, %v302
    %s304 = scalar_lea.vmem [#allocation8], %s120
    %305 = vst [vmem:[%s304] sm:$0xff] %v284
    %s306 = scalar_lea.vmem [#allocation8], %s123
    %307 = vst [vmem:[%s306] sm:$0xff] %v286
    %s308 = scalar_lea.vmem [#allocation8], %s126
    %309 = vst [vmem:[%s308] sm:$0xff] %v288
    %s310 = scalar_lea.vmem [#allocation5], %s60
    %v311 = vld [vmem:[%s310] sm:$0xff]
    %v312 = vmul.f32 %v293, %v311
    %v313 = vadd.f32 %v284, %v312
    %v314 = vmul.f32 %v298, %v311
    %v315 = vadd.f32 %v286, %v314
    %v316 = vmul.f32 %v303, %v311
    %v317 = vadd.f32 %v288, %v316
    %s318 = scalar_lea.vmem [#allocation8], %s139
    %319 = vst [vmem:[%s318] sm:$0xff] %v313
    %s320 = scalar_lea.vmem [#allocation8], %s142
    %321 = vst [vmem:[%s320] sm:$0xff] %v315
    %s322 = scalar_lea.vmem [#allocation8], %s145
    %323 = vst [vmem:[%s322] sm:$0xff] %v317
    %s324 = scalar_lea.vmem [#allocation5], %s73
    %v325 = vld [vmem:[%s324] sm:$0xff]
    %v326 = vmul.f32 %v325, -1.0
    %v327 = vmul.f32 %v187, %v326
    %v328 = vadd.f32 %v178, %v327
    %v329 = vmul.f32 %v192, %v326
    %v330 = vadd.f32 %v180, %v329
    %v331 = vmul.f32 %v197, %v326
    %v332 = vadd.f32 %v182, %v331
    %s333 = scalar_lea.vmem [#allocation8], %s234
    %334 = vst [vmem:[%s333] sm:$0xff] %v328
    %s335 = scalar_lea.vmem [#allocation8], %s237
    %336 = vst [vmem:[%s335] sm:$0xff] %v330
    %s337 = scalar_lea.vmem [#allocation8], %s240
    %338 = vst [vmem:[%s337] sm:$0xff] %v332
    // Predicated region
    $region26: #{tpu_custom_call.1} parent=1 // pred_check
      _
    $region27: #{tpu_custom_call.1} parent=1 // pred_check_branch
      %340 = sbr.rel (0) target = $region29
    $region28: #{tpu_custom_call.1} parent=1 // pred_region
      %s342 = ssub.s32 1920, 1920
      %343 = vsyncadd [#allocation4], %s342
      %s344 = sshll.u32 [#allocation8], 4
      %s345 = int_to_ptr.vmem [resolvable:$true] %s344
      %350 = dma.vmem_to_hbm [thread:$0]  %s345, 1920, %s3, [#allocation4], 128, 128, 8
    $region29: #{tpu_custom_call.1} parent=1 // pred_fallthru
      _
    // Predicated region
    $region30: #{tpu_custom_call.1} parent=1 // pred_check
      _
    $region31: #{tpu_custom_call.1} parent=1 // pred_check_branch
      %352 = sbr.rel (0) target = $region33
    $region32: #{tpu_custom_call.1} parent=1 // pred_region
      %353 = dma.done [#allocation4], 1920
    $region33: #{tpu_custom_call.1} parent=1 // pred_fallthru
      _
    %354 = vsyncpa [#allocation3], 1
    %355 = vsyncpa [#allocation6], 1
    %356 = vsyncpa [#allocation4], 1

</llo_original>
